<compile_context>
chip_gen: v5e
topology: v5e:2x2
jax: 0.10.0
libtpu: 0.0.40
codegen_flags: <defaults>
</compile_context>

<pallas_src>
import jax
import jax.numpy as jnp
from jax.experimental import pallas as pl
from jax.experimental.pallas import tpu as pltpu

_LANES = 128  # weight buffer lane width (layout pads to 128 lanes anyway)


def _round_up(n, m):
    return ((n + m - 1) // m) * m


def pack_params(params, nx, n_nodes=64, compute_dtype=jnp.float32):
    """Pack all weights (transposed: out-features on sublanes) into one
    (rows, 128) buffer and all biases into one (rows, 1) f32 column buffer.

    Row layout (all offsets 8-aligned):
      [0, n_h)            : w1^T   (fused stage 1, hidden pre-activation rows)
      [n_h, n_h+nx)       : wl^T   (fused stage 1, residual linear rows)
      [.., N1P)           : zero pad
      [N1P, N1P+n_h)      : w2^T
      [N1P+n_h, ..+nx)    : w3^T   (padded to NXP rows)
    Stage-1 weight columns are the input features (x first, then flattened u),
    zero-padded to IN_P = round_up8(nx + nu_flat)."""
    n_in = params["w1"].shape[0]
    nu_flat = n_in - nx
    n_h = n_nodes
    assert n_h % 8 == 0
    in_p = _round_up(n_in, 8)
    nxp = _round_up(nx, 8)
    n1p = n_h + nxp
    rows = n1p + n_h + nxp
    assert in_p <= _LANES and n_h <= _LANES

    W = jnp.zeros((rows, _LANES), jnp.float32)
    W = W.at[0:n_h, 0:n_in].set(params["w1"].T)                      # fused stage 1
    W = W.at[n_h:n_h + nx, 0:n_in].set(params["wl"].T)
    W = W.at[n1p:n1p + n_h, 0:n_h].set(params["w2"].T)               # stage 2
    W = W.at[n1p + n_h:n1p + n_h + nx, 0:n_h].set(params["w3"].T)    # stage 3

    Bv = jnp.zeros((rows, 1), jnp.float32)                           # biases stay f32
    Bv = Bv.at[0:n_h, 0].set(params["b1"].reshape(-1))
    Bv = Bv.at[n_h:n_h + nx, 0].set(params["bl"].reshape(-1))
    Bv = Bv.at[n1p:n1p + n_h, 0].set(params["b2"].reshape(-1))
    Bv = Bv.at[n1p + n_h:n1p + n_h + nx, 0].set(params["b3"].reshape(-1))

    layout = dict(nx=nx, nu_flat=nu_flat, n_h=n_h, in_p=in_p, nxp=nxp,
                  n1p=n1p, rows=rows)
    return W.astype(compute_dtype), Bv, layout


def _make_kernel(layout, act_dtype=jnp.float32):
    nx, n_h = layout["nx"], layout["n_h"]
    in_p, nxp, n1p = layout["in_p"], layout["nxp"], layout["n1p"]
    o_w2 = n1p            # w2^T rows
    o_w3 = n1p + n_h      # w3^T rows

    def _tanh(v):
        if act_dtype == jnp.float32:
            return jnp.tanh(v)
        # bf16 EUP path (v6e/v7x): tanh in bf16, keep accumulation in f32.
        return jnp.tanh(v.astype(act_dtype)).astype(jnp.float32)

    def kernel(xin_ref, w_ref, b_ref, o_ref):
        cdt = w_ref.dtype
        xin = xin_ref[...].astype(cdt)                                # (IN_P, TB)

        # Fused stage 1: one MXU pass produces both the first hidden
        # pre-activation (rows [0, n_h)) and the residual linear path
        # (rows [n_h, n_h+nx)).  All slices are sublane-aligned.
        z1 = (jnp.dot(w_ref[0:n1p, 0:in_p], xin,
                      preferred_element_type=jnp.float32)
              + b_ref[0:n1p, :])                                      # (N1P, TB) f32
        h = _tanh(z1[0:n_h, :])                                       # (n_h, TB)
        lin = z1[n_h:n1p, :]                                          # (NXP, TB); pad rows are exactly 0

        # Stage 2: hidden -> hidden.
        h2 = _tanh(jnp.dot(w_ref[o_w2:o_w2 + n_h, 0:n_h], h.astype(cdt),
                           preferred_element_type=jnp.float32)
                   + b_ref[o_w2:o_w2 + n_h, :])                       # (n_h, TB)

        # Stage 3: hidden -> nx (padded to NXP rows), plus the residual path.
        nl = (jnp.dot(w_ref[o_w3:o_w3 + nxp, 0:n_h], h2.astype(cdt),
                      preferred_element_type=jnp.float32)
              + b_ref[o_w3:o_w3 + nxp, :])                            # (NXP, TB)

        out = lin + nl                                                # (NXP, TB)
        # Lane-dense store: batch is the last (lane) axis.
        o_ref[...] = out[0:nx, :].astype(o_ref.dtype)

    return kernel


def _pick_tb(B, block_b):
    """Batch-tile (lane) width.  Single tile for tiny B; otherwise at least two
    128-multiple tiles so the 'parallel' axis feeds both v7x TensorCores."""
    if B <= 256:
        return B
    return max(128, min(_round_up(block_b, 128), _round_up((B + 1) // 2, 128)))


def default_state_net_forward(x, u, packed_w, packed_b, layout, *,
                              block_b=8192, act_dtype=jnp.float32):
    """x: (B, nx), u: (B, *nu). Returns (B, nx) float32."""
    B = x.shape[0]
    nx, nu_flat, in_p = layout["nx"], layout["nu_flat"], layout["in_p"]
    n_in = nx + nu_flat
    u2 = u.reshape(B, -1)
    assert u2.shape[1] == nu_flat and x.shape[1] == nx

    # Batch-in-lanes packed input (IN_P, B): x features first, then u features,
    # zero-padded to 8 sublanes.  Costs ~B*(n_in*8) bytes of HBM once — negligible
    # — and makes every in-kernel load/store lane-dense along the batch axis.
    net_in = jnp.concatenate([x, u2], axis=1)                         # (B, n_in)
    if in_p > n_in:
        net_in = jnp.pad(net_in, ((0, 0), (0, in_p - n_in)))          # feature-axis pad only
    xin = net_in.T                                                    # (IN_P, B)

    tb = _pick_tb(B, block_b)
    grid = (pl.cdiv(B, tb),)   # ragged last tile handled by Pallas block masking

    out_t = pl.pallas_call(
        _make_kernel(layout, act_dtype=act_dtype),
        out_shape=jax.ShapeDtypeStruct((nx, B), jnp.float32),
        grid=grid,
        in_specs=[
            pl.BlockSpec((in_p, tb), lambda i: (0, i)),
            # constant index_map -> packed weights/biases stay VMEM-resident
            pl.BlockSpec(packed_w.shape, lambda i: (0, 0)),
            pl.BlockSpec(packed_b.shape, lambda i: (0, 0)),
        ],
        out_specs=pl.BlockSpec((nx, tb), lambda i: (0, i)),
        compiler_params=pltpu.CompilerParams(
            # independent batch tiles -> shard across v7x's 2 TensorCores
            dimension_semantics=("parallel",),
            # covers v5e's 16 MiB scoped default; ~1 KiB VMEM per batch column
            vmem_limit_bytes=32 << 20),
    )(xin, packed_w, packed_b)
    return out_t.T


def init_params(key, nx, nu_flat, n_nodes=64):
    """Deterministic parameter init matching the module's shapes.

    feed_forward_nn biases are constant-0 (as in the PyTorch __init__);
    net_lin bias is randomly initialized (PyTorch default init)."""
    n_in = nx + nu_flat
    ks = jax.random.split(key, 5)

    def lin_w(k, fan_in, fan_out):
        bound = 1.0 / jnp.sqrt(fan_in)
        return jax.random.uniform(k, (fan_in, fan_out), jnp.float32, -bound, bound)

    return {
        # residual linear path: Linear(n_in, nx)
        "wl": lin_w(ks[0], n_in, nx),
        "bl": jax.random.uniform(ks[1], (1, nx), jnp.float32,
                                 -1.0 / jnp.sqrt(n_in), 1.0 / jnp.sqrt(n_in)),
        # feed_forward_nn: Linear(n_in,64) -> Tanh -> Linear(64,64) -> Tanh -> Linear(64,nx)
        "w1": lin_w(ks[2], n_in, n_nodes),
        "b1": jnp.zeros((1, n_nodes), jnp.float32),
        "w2": lin_w(ks[3], n_nodes, n_nodes),
        "b2": jnp.zeros((1, n_nodes), jnp.float32),
        "w3": lin_w(ks[4], n_nodes, nx),
        "b3": jnp.zeros((1, nx), jnp.float32),
    }


def reference_forward(x, u, params):
    """Pure-JAX reference for a sanity check."""
    net_in = jnp.concatenate([x, u.reshape(x.shape[0], -1)], axis=1)
    lin = net_in @ params["wl"] + params["bl"]
    h = jnp.tanh(net_in @ params["w1"] + params["b1"])
    h = jnp.tanh(h @ params["w2"] + params["b2"])
    nl = h @ params["w3"] + params["b3"]
    return lin + nl


if __name__ == "__main__":
    # Full-f32 matmuls for the reference path (keeps the comparison tight).
    jax.config.update("jax_default_matmul_precision", "highest")

    nx, nu, n_nodes = 4, 2, 64
    key = jax.random.PRNGKey(0)
    kx, ku, kp = jax.random.split(key, 3)
    params = init_params(kp, nx, nu, n_nodes)
    packed_w, packed_b, layout = pack_params(params, nx, n_nodes,
                                             compute_dtype=jnp.float32)

    # Primary small-shape check (single batch tile).
    B = 8
    x = jax.random.normal(kx, (B, nx), jnp.float32)
    u = jax.random.normal(ku, (B, nu), jnp.float32)
    out = jax.block_until_ready(
        default_state_net_forward(x, u, packed_w, packed_b, layout))
    ref = reference_forward(x, u, params)
    assert out.shape == (B, nx)
    assert jnp.allclose(out, ref, atol=1e-4, rtol=1e-4)

    # Multi-tile + ragged-tail check (grid of 2 batch tiles, tb=256, B=300).
    B2 = 300
    x2 = jax.random.normal(jax.random.PRNGKey(1), (B2, nx), jnp.float32)
    u2 = jax.random.normal(jax.random.PRNGKey(2), (B2, nu), jnp.float32)
    out2 = jax.block_until_ready(
        default_state_net_forward(x2, u2, packed_w, packed_b, layout))
    ref2 = reference_forward(x2, u2, params)
    assert out2.shape == (B2, nx)
    assert jnp.allclose(out2, ref2, atol=1e-4, rtol=1e-4)

    print("KERNEL_OK")
</pallas_src>

<mosaic_0001>
module attributes {stable_mosaic.version = 11 : i64} {
  func.func @kernel(%arg0: i32, %arg1: memref<8x8xf32, #tpu.memory_space<vmem>>, %arg2: memref<144x128xf32, #tpu.memory_space<vmem>>, %arg3: memref<144x1xf32, #tpu.memory_space<vmem>>, %arg4: memref<4x8xf32, #tpu.memory_space<vmem>>) attributes {dimension_semantics = [#tpu.dimension_semantics<parallel>], iteration_bounds = array<i64: 1>, scalar_prefetch = 0 : i64, scratch_operands = 0 : i64, tpu.core_type = #tpu.core_type<tc>, window_params = [{transform_indices = @transform_0, window_bounds = array<i64: 8, 8>}, {pipeline_mode = #tpu.pipeline_mode<synchronous>, transform_indices = @transform_1, window_bounds = array<i64: 144, 128>}, {pipeline_mode = #tpu.pipeline_mode<synchronous>, transform_indices = @transform_2, window_bounds = array<i64: 144, 1>}, {transform_indices = @transform_3, window_bounds = array<i64: 4, 8>}]} {
    %c0 = arith.constant 0 : index
    %c0_0 = arith.constant 0 : index
    %0 = vector.load %arg1[%c0, %c0_0] : memref<8x8xf32, #tpu.memory_space<vmem>>, vector<8x8xf32>
    %c0_1 = arith.constant 0 : index
    %c0_2 = arith.constant 0 : index
    %1 = vector.load %arg2[%c0_1, %c0_2] : memref<144x128xf32, #tpu.memory_space<vmem>>, vector<72x8xf32>
    %cst = arith.constant dense<0.000000e+00> : vector<72x8xf32>
    %2 = tpu.matmul %1, %0, %cst {dimension_numbers = #tpu.dot_dimension_numbers<[1], [0], [0], [1], [0, 0, 1, 1], [], []>, precision = #tpu.contract_precision<fp32>} : vector<72x8xf32>, vector<8x8xf32>, vector<72x8xf32> -> vector<72x8xf32>
    %c0_3 = arith.constant 0 : index
    %c0_4 = arith.constant 0 : index
    %3 = vector.load %arg3[%c0_3, %c0_4] : memref<144x1xf32, #tpu.memory_space<vmem>>, vector<72x1xf32>
    %4 = vector.broadcast %3 : vector<72x1xf32> to vector<72x8xf32>
    %5 = arith.addf %2, %4 : vector<72x8xf32>
    %6 = vector.extract_strided_slice %5 {offsets = [0, 0], sizes = [64, 8], strides = [1, 1]} : vector<72x8xf32> to vector<64x8xf32>
    %7 = math.tanh %6 : vector<64x8xf32>
    %8 = vector.extract_strided_slice %5 {offsets = [64, 0], sizes = [8, 8], strides = [1, 1]} : vector<72x8xf32> to vector<8x8xf32>
    %c72 = arith.constant 72 : index
    %c0_5 = arith.constant 0 : index
    %9 = vector.load %arg2[%c72, %c0_5] : memref<144x128xf32, #tpu.memory_space<vmem>>, vector<64x64xf32>
    %cst_6 = arith.constant dense<0.000000e+00> : vector<64x8xf32>
    %10 = tpu.matmul %9, %7, %cst_6 {dimension_numbers = #tpu.dot_dimension_numbers<[1], [0], [0], [1], [0, 0, 1, 1], [], []>, precision = #tpu.contract_precision<fp32>} : vector<64x64xf32>, vector<64x8xf32>, vector<64x8xf32> -> vector<64x8xf32>
    %c72_7 = arith.constant 72 : index
    %c0_8 = arith.constant 0 : index
    %11 = vector.load %arg3[%c72_7, %c0_8] : memref<144x1xf32, #tpu.memory_space<vmem>>, vector<64x1xf32>
    %12 = vector.broadcast %11 : vector<64x1xf32> to vector<64x8xf32>
    %13 = arith.addf %10, %12 : vector<64x8xf32>
    %14 = math.tanh %13 : vector<64x8xf32>
    %c136 = arith.constant 136 : index
    %c0_9 = arith.constant 0 : index
    %15 = vector.load %arg2[%c136, %c0_9] : memref<144x128xf32, #tpu.memory_space<vmem>>, vector<8x64xf32>
    %cst_10 = arith.constant dense<0.000000e+00> : vector<8x8xf32>
    %16 = tpu.matmul %15, %14, %cst_10 {dimension_numbers = #tpu.dot_dimension_numbers<[1], [0], [0], [1], [0, 0, 1, 1], [], []>, precision = #tpu.contract_precision<fp32>} : vector<8x64xf32>, vector<64x8xf32>, vector<8x8xf32> -> vector<8x8xf32>
    %c136_11 = arith.constant 136 : index
    %c0_12 = arith.constant 0 : index
    %17 = vector.load %arg3[%c136_11, %c0_12] : memref<144x1xf32, #tpu.memory_space<vmem>>, vector<8x1xf32>
    %18 = vector.broadcast %17 : vector<8x1xf32> to vector<8x8xf32>
    %19 = arith.addf %16, %18 : vector<8x8xf32>
    %20 = arith.addf %8, %19 : vector<8x8xf32>
    %21 = vector.extract_strided_slice %20 {offsets = [0, 0], sizes = [4, 8], strides = [1, 1]} : vector<8x8xf32> to vector<4x8xf32>
    %c0_13 = arith.constant 0 : index
    %c0_14 = arith.constant 0 : index
    %22 = vector.load %arg4[%c0_13, %c0_14] : memref<4x8xf32, #tpu.memory_space<vmem>>, vector<4x8xf32>
    tpu.vector_store %arg4[%c0_13, %c0_14], %21 {strides = array<i32>} : memref<4x8xf32, #tpu.memory_space<vmem>>, vector<4x8xf32>,
    return
  }
  func.func @transform_0(%arg0: i32) -> (i32, i32) {
    %c0_i32 = arith.constant 0 : i32
    %c0_i32_0 = arith.constant 0 : i32
    return %c0_i32, %arg0 : i32, i32
  }
  func.func @transform_1(%arg0: i32) -> (i32, i32) {
    %c0_i32 = arith.constant 0 : i32
    %c0_i32_0 = arith.constant 0 : i32
    %c0_i32_1 = arith.constant 0 : i32
    return %c0_i32, %c0_i32_0 : i32, i32
  }
  func.func @transform_2(%arg0: i32) -> (i32, i32) {
    %c0_i32 = arith.constant 0 : i32
    %c0_i32_0 = arith.constant 0 : i32
    %c0_i32_1 = arith.constant 0 : i32
    return %c0_i32, %c0_i32_0 : i32, i32
  }
  func.func @transform_3(%arg0: i32) -> (i32, i32) {
    %c0_i32 = arith.constant 0 : i32
    %c0_i32_0 = arith.constant 0 : i32
    return %c0_i32, %arg0 : i32, i32
  }
}

</mosaic_0001>

<llo_original>
// kernel: tpu_custom_call.1
$region0: #{tpu_custom_call.1}
  #allocation0 [shape = 'u32[]', space=smem, size = 0x4, offset = 0x4, fixed_abs, tag = 'smem constant byte address 0x4 - core index']
  #allocation1 [shape = 'u32[72,128]{1,0:T(1,128)}', space=vmem, size = 0x9000, scoped, tag = 'internal scratch']
  %s0 = inlined_call_operand.hbm [shape: f32[8,8], index: 0, kind: input, shape index: {}]
  %s1 = inlined_call_operand.vmem [shape: f32[144,128], index: 1, kind: input, shape index: {}]
  %s2 = inlined_call_operand.vmem [shape: f32[144,1], index: 2, kind: input, shape index: {}]
  %s3 = inlined_call_operand.hbm [shape: f32[4,8], index: 3, kind: output, shape index: {}]
  %s4 = sld [smem:[#allocation0]]
  $region26: #{tpu_custom_call.1} parent=0
    _
  %s6 = ssub.s32 1, %s4
  %s7 = scalar_select 0, %s6, %s4
  $region1: #{tpu_custom_call.1} parent=0
    #allocation2 [shape = 'u8[4096]{0}', space=vmem, size = 0x1000, scoped, tag = 'input window, operand 0, single buffered']
    #allocation3 [shape = 's32[1]{0}', space=sflag, size = 0x4, scoped, tag = 'scoped memory for tpu_custom_call.1']
    #allocation4 [shape = 's32[1]{0}', space=sflag, size = 0x4, scoped, tag = 'scoped memory for tpu_custom_call.1']
    #allocation5 [shape = 'u8[2048]{0}', space=vmem, size = 0x800, scoped, tag = 'output window, operand 0, single buffered']
    %8 = vsyncpa [#allocation3], 0
    %9 = vsyncpa [#allocation4], 0
    // Predicated region
    $region2: #{tpu_custom_call.1} parent=1 // pred_check
      _
    $region3: #{tpu_custom_call.1} parent=1 // pred_check_branch
      %11 = sbr.rel (0) target = $region5
    $region4: #{tpu_custom_call.1} parent=1 // pred_region
      %13 = vsyncadd [#allocation3], 0
      %s15 = sshll.u32 %s0, 4
      %s16 = int_to_ptr.hbm [resolvable:$true] %s15
      %s17 = sshll.u32 [#allocation2], 4
      %s18 = int_to_ptr.vmem [resolvable:$true] %s17
      %20 = dma.hbm_to_vmem [thread:$0]  %s16, 128, %s18, [#allocation3]
    $region5: #{tpu_custom_call.1} parent=1 // pred_fallthru
      _
    // Predicated region
    $region6: #{tpu_custom_call.1} parent=1 // pred_check
      _
    $region7: #{tpu_custom_call.1} parent=1 // pred_check_branch
      %22 = sbr.rel (0) target = $region9
    $region8: #{tpu_custom_call.1} parent=1 // pred_region
      _
    $region9: #{tpu_custom_call.1} parent=1 // pred_fallthru
      _
    // Predicated region
    $region10: #{tpu_custom_call.1} parent=1 // pred_check
      _
    $region11: #{tpu_custom_call.1} parent=1 // pred_check_branch
      %24 = sbr.rel (0) target = $region13
    $region12: #{tpu_custom_call.1} parent=1 // pred_region
      _
    $region13: #{tpu_custom_call.1} parent=1 // pred_fallthru
      _
    // Predicated region
    $region14: #{tpu_custom_call.1} parent=1 // pred_check
      _
    $region15: #{tpu_custom_call.1} parent=1 // pred_check_branch
      %26 = sbr.rel (0) target = $region17
    $region16: #{tpu_custom_call.1} parent=1 // pred_region
      %28 = dma.done [#allocation3], 128
    $region17: #{tpu_custom_call.1} parent=1 // pred_fallthru
      _
    %v29 = vld [vmem:[#allocation2] sm:$0xff]
    %v30 = vld [vmem:[%s1] sm:$0xff]
    %v31 = vld [vmem:[%s1 + $0x8] sm:$0xff]
    %v32 = vld [vmem:[%s1 + $0x10] sm:$0xff]
    %v33 = vld [vmem:[%s1 + $0x18] sm:$0xff]
    %v34 = vld [vmem:[%s1 + $0x20] sm:$0xff]
    %v35 = vld [vmem:[%s1 + $0x28] sm:$0xff]
    %v36 = vld [vmem:[%s1 + $0x30] sm:$0xff]
    %v37 = vld [vmem:[%s1 + $0x38] sm:$0xff]
    %v38 = vld [vmem:[%s1 + $0x40] sm:$0xff]
    %v39 = vld [vmem:[%s2] sm:$0xff]
    %v40 = vld [vmem:[%s2 + $0x8] sm:$0xff]
    %v41 = vld [vmem:[%s2 + $0x10] sm:$0xff]
    %v42 = vld [vmem:[%s2 + $0x18] sm:$0xff]
    %v43 = vld [vmem:[%s2 + $0x20] sm:$0xff]
    %v44 = vld [vmem:[%s2 + $0x28] sm:$0xff]
    %v45 = vld [vmem:[%s2 + $0x30] sm:$0xff]
    %v46 = vld [vmem:[%s2 + $0x38] sm:$0xff]
    %v47 = vld [vmem:[%s2 + $0x40] sm:$0xff]
    %49 = vset.pattern.permute.xlu0 0
    %50 = vperm.xlu0 %49, %v39
    %v51 = vpop.permute.xlu0 %50
    %54 = vset.pattern.permute.xlu0 0
    %55 = vperm.xlu0 %54, %v40
    %v56 = vpop.permute.xlu0 %55
    %59 = vset.pattern.permute.xlu0 0
    %60 = vperm.xlu0 %59, %v41
    %v61 = vpop.permute.xlu0 %60
    %64 = vset.pattern.permute.xlu0 0
    %65 = vperm.xlu0 %64, %v42
    %v66 = vpop.permute.xlu0 %65
    %69 = vset.pattern.permute.xlu0 0
    %70 = vperm.xlu0 %69, %v43
    %v71 = vpop.permute.xlu0 %70
    %74 = vset.pattern.permute.xlu0 0
    %75 = vperm.xlu0 %74, %v44
    %v76 = vpop.permute.xlu0 %75
    %79 = vset.pattern.permute.xlu0 0
    %80 = vperm.xlu0 %79, %v45
    %v81 = vpop.permute.xlu0 %80
    %84 = vset.pattern.permute.xlu0 0
    %85 = vperm.xlu0 %84, %v46
    %v86 = vpop.permute.xlu0 %85
    %89 = vset.pattern.permute.xlu0 0
    %90 = vperm.xlu0 %89, %v47
    %v91 = vpop.permute.xlu0 %90
    %vm93 = vcmask 64512
    %v95 = vsel %vm93, %v30, 0
    %v98 = vsel %vm93, %v31, 0
    %v101 = vsel %vm93, %v32, 0
    %v104 = vsel %vm93, %v33, 0
    %v107 = vsel %vm93, %v34, 0
    %v110 = vsel %vm93, %v35, 0
    %v113 = vsel %vm93, %v36, 0
    %v116 = vsel %vm93, %v37, 0
    %v119 = vsel %vm93, %v38, 0
    %121 = vmatpush.msra.mxu0 0.0
    %122 = vmatpush.msra.mxu0 0.0
    %123 = vmatpush.msra.mxu0 0.0
    %124 = vmatpush.msra.mxu0 0.0
    %125 = vmatpush.msra.mxu0 0.0
    %126 = vmatpush.msra.mxu0 0.0
    %127 = vmatpush.msra.mxu0 0.0
    %128 = vmatpush.msra.mxu0 0.0
    %129 = vmatpush.msra.mxu0 0.0
    %130 = vmatpush.msra.mxu0 0.0
    %131 = vmatpush.msra.mxu0 0.0
    %132 = vmatpush.msra.mxu0 0.0
    %133 = vmatpush.msra.mxu0 0.0
    %134 = vmatpush.msra.mxu0 0.0
    %135 = vmatpush.msra.mxu0 0.0
    %v136 = vand.u32 %v29, 4294901760
    %137 = vmatpush.msra.mxu0 %v136
    %v138 = vand.u32 %v95, 4294901760
    %v139 = vsub.f32 %v95, %v138
    %v140 = vand.u32 %v139, 4294901760
    %v141 = vsub.f32 %v139, %v140
    %v142 = vand.u32 %v141, 4294901760
    %143 = vmatmul.f32.gmra.mxu0 %v142
    %v144 = vpop.f32.mrf.mxu0
    %v145 = vadd.f32 %v51, %v144
    %v146 = vand.u32 %v98, 4294901760
    %v147 = vsub.f32 %v98, %v146
    %v148 = vand.u32 %v147, 4294901760
    %v149 = vsub.f32 %v147, %v148
    %v150 = vand.u32 %v149, 4294901760
    %151 = vmatmul.f32.gmra.mxu0 %v150
    %v152 = vpop.f32.mrf.mxu0
    %v153 = vadd.f32 %v56, %v152
    %v154 = vand.u32 %v101, 4294901760
    %v155 = vsub.f32 %v101, %v154
    %v156 = vand.u32 %v155, 4294901760
    %v157 = vsub.f32 %v155, %v156
    %v158 = vand.u32 %v157, 4294901760
    %159 = vmatmul.f32.gmra.mxu0 %v158
    %v160 = vpop.f32.mrf.mxu0
    %v161 = vadd.f32 %v61, %v160
    %v162 = vand.u32 %v104, 4294901760
    %v163 = vsub.f32 %v104, %v162
    %v164 = vand.u32 %v163, 4294901760
    %v165 = vsub.f32 %v163, %v164
    %v166 = vand.u32 %v165, 4294901760
    %167 = vmatmul.f32.gmra.mxu0 %v166
    %v168 = vpop.f32.mrf.mxu0
    %v169 = vadd.f32 %v66, %v168
    %v170 = vand.u32 %v107, 4294901760
    %v171 = vsub.f32 %v107, %v170
    %v172 = vand.u32 %v171, 4294901760
    %v173 = vsub.f32 %v171, %v172
    %v174 = vand.u32 %v173, 4294901760
    %175 = vmatmul.f32.gmra.mxu0 %v174
    %v176 = vpop.f32.mrf.mxu0
    %v177 = vadd.f32 %v71, %v176
    %v178 = vand.u32 %v110, 4294901760
    %v179 = vsub.f32 %v110, %v178
    %v180 = vand.u32 %v179, 4294901760
    %v181 = vsub.f32 %v179, %v180
    %v182 = vand.u32 %v181, 4294901760
    %183 = vmatmul.f32.gmra.mxu0 %v182
    %v184 = vpop.f32.mrf.mxu0
    %v185 = vadd.f32 %v76, %v184
    %v186 = vand.u32 %v113, 4294901760
    %v187 = vsub.f32 %v113, %v186
    %v188 = vand.u32 %v187, 4294901760
    %v189 = vsub.f32 %v187, %v188
    %v190 = vand.u32 %v189, 4294901760
    %191 = vmatmul.f32.gmra.mxu0 %v190
    %v192 = vpop.f32.mrf.mxu0
    %v193 = vadd.f32 %v81, %v192
    %v194 = vand.u32 %v116, 4294901760
    %v195 = vsub.f32 %v116, %v194
    %v196 = vand.u32 %v195, 4294901760
    %v197 = vsub.f32 %v195, %v196
    %v198 = vand.u32 %v197, 4294901760
    %199 = vmatmul.f32.gmra.mxu0 %v198
    %v200 = vpop.f32.mrf.mxu0
    %v201 = vadd.f32 %v86, %v200
    %v202 = vand.u32 %v119, 4294901760
    %v203 = vsub.f32 %v119, %v202
    %v204 = vand.u32 %v203, 4294901760
    %v205 = vsub.f32 %v203, %v204
    %v206 = vand.u32 %v205, 4294901760
    %207 = vmatmul.f32.gmra.mxu0 %v206
    %v208 = vpop.f32.mrf.mxu0
    %v209 = vadd.f32 %v91, %v208
    %210 = vdwg.mxu0
    %211 = vmatpush.msra.mxu0 0.0
    %212 = vmatpush.msra.mxu0 0.0
    %213 = vmatpush.msra.mxu0 0.0
    %214 = vmatpush.msra.mxu0 0.0
    %215 = vmatpush.msra.mxu0 0.0
    %216 = vmatpush.msra.mxu0 0.0
    %217 = vmatpush.msra.mxu0 0.0
    %218 = vmatpush.msra.mxu0 0.0
    %219 = vmatpush.msra.mxu0 0.0
    %220 = vmatpush.msra.mxu0 0.0
    %221 = vmatpush.msra.mxu0 0.0
    %222 = vmatpush.msra.mxu0 0.0
    %223 = vmatpush.msra.mxu0 0.0
    %224 = vmatpush.msra.mxu0 0.0
    %225 = vmatpush.msra.mxu0 0.0
    %v226 = vand.u32 %v29, 4294901760
    %v227 = vsub.f32 %v29, %v226
    %v228 = vand.u32 %v227, 4294901760
    %v229 = vsub.f32 %v227, %v228
    %v230 = vand.u32 %v229, 4294901760
    %231 = vmatpush.msra.mxu0 %v230
    %v232 = vand.u32 %v95, 4294901760
    %233 = vmatmul.f32.gmra.mxu0 %v232
    %v234 = vpop.f32.mrf.mxu0
    %v235 = vadd.f32 %v145, %v234
    %v236 = vand.u32 %v98, 4294901760
    %237 = vmatmul.f32.gmra.mxu0 %v236
    %v238 = vpop.f32.mrf.mxu0
    %v239 = vadd.f32 %v153, %v238
    %v240 = vand.u32 %v101, 4294901760
    %241 = vmatmul.f32.gmra.mxu0 %v240
    %v242 = vpop.f32.mrf.mxu0
    %v243 = vadd.f32 %v161, %v242
    %v244 = vand.u32 %v104, 4294901760
    %245 = vmatmul.f32.gmra.mxu0 %v244
    %v246 = vpop.f32.mrf.mxu0
    %v247 = vadd.f32 %v169, %v246
    %v248 = vand.u32 %v107, 4294901760
    %249 = vmatmul.f32.gmra.mxu0 %v248
    %v250 = vpop.f32.mrf.mxu0
    %v251 = vadd.f32 %v177, %v250
    %v252 = vand.u32 %v110, 4294901760
    %253 = vmatmul.f32.gmra.mxu0 %v252
    %v254 = vpop.f32.mrf.mxu0
    %v255 = vadd.f32 %v185, %v254
    %v256 = vand.u32 %v113, 4294901760
    %257 = vmatmul.f32.gmra.mxu0 %v256
    %v258 = vpop.f32.mrf.mxu0
    %v259 = vadd.f32 %v193, %v258
    %v260 = vand.u32 %v116, 4294901760
    %261 = vmatmul.f32.gmra.mxu0 %v260
    %v262 = vpop.f32.mrf.mxu0
    %v263 = vadd.f32 %v201, %v262
    %v264 = vand.u32 %v119, 4294901760
    %265 = vmatmul.f32.gmra.mxu0 %v264
    %v266 = vpop.f32.mrf.mxu0
    %v267 = vadd.f32 %v209, %v266
    %268 = vdwg.mxu0
    %269 = vmatpush.msra.mxu0 0.0
    %270 = vmatpush.msra.mxu0 0.0
    %271 = vmatpush.msra.mxu0 0.0
    %272 = vmatpush.msra.mxu0 0.0
    %273 = vmatpush.msra.mxu0 0.0
    %274 = vmatpush.msra.mxu0 0.0
    %275 = vmatpush.msra.mxu0 0.0
    %276 = vmatpush.msra.mxu0 0.0
    %277 = vmatpush.msra.mxu0 0.0
    %278 = vmatpush.msra.mxu0 0.0
    %279 = vmatpush.msra.mxu0 0.0
    %280 = vmatpush.msra.mxu0 0.0
    %281 = vmatpush.msra.mxu0 0.0
    %282 = vmatpush.msra.mxu0 0.0
    %283 = vmatpush.msra.mxu0 0.0
    %v284 = vand.u32 %v29, 4294901760
    %v285 = vsub.f32 %v29, %v284
    %286 = vmatpush.msra.mxu0 %v285
    %v287 = vand.u32 %v95, 4294901760
    %v288 = vsub.f32 %v95, %v287
    %289 = vmatmul.f32.gmra.mxu0 %v288
    %v290 = vpop.f32.mrf.mxu0
    %v291 = vadd.f32 %v235, %v290
    %v292 = vand.u32 %v98, 4294901760
    %v293 = vsub.f32 %v98, %v292
    %294 = vmatmul.f32.gmra.mxu0 %v293
    %v295 = vpop.f32.mrf.mxu0
    %v296 = vadd.f32 %v239, %v295
    %v297 = vand.u32 %v101, 4294901760
    %v298 = vsub.f32 %v101, %v297
    %299 = vmatmul.f32.gmra.mxu0 %v298
    %v300 = vpop.f32.mrf.mxu0
    %v301 = vadd.f32 %v243, %v300
    %v302 = vand.u32 %v104, 4294901760
    %v303 = vsub.f32 %v104, %v302
    %304 = vmatmul.f32.gmra.mxu0 %v303
    %v305 = vpop.f32.mrf.mxu0
    %v306 = vadd.f32 %v247, %v305
    %v307 = vand.u32 %v107, 4294901760
    %v308 = vsub.f32 %v107, %v307
    %309 = vmatmul.f32.gmra.mxu0 %v308
    %v310 = vpop.f32.mrf.mxu0
    %v311 = vadd.f32 %v251, %v310
    %v312 = vand.u32 %v110, 4294901760
    %v313 = vsub.f32 %v110, %v312
    %314 = vmatmul.f32.gmra.mxu0 %v313
    %v315 = vpop.f32.mrf.mxu0
    %v316 = vadd.f32 %v255, %v315
    %v317 = vand.u32 %v113, 4294901760
    %v318 = vsub.f32 %v113, %v317
    %319 = vmatmul.f32.gmra.mxu0 %v318
    %v320 = vpop.f32.mrf.mxu0
    %v321 = vadd.f32 %v259, %v320
    %v322 = vand.u32 %v116, 4294901760
    %v323 = vsub.f32 %v116, %v322
    %324 = vmatmul.f32.gmra.mxu0 %v323
    %v325 = vpop.f32.mrf.mxu0
    %v326 = vadd.f32 %v263, %v325
    %v327 = vand.u32 %v119, 4294901760
    %v328 = vsub.f32 %v119, %v327
    %329 = vmatmul.f32.gmra.mxu0 %v328
    %v330 = vpop.f32.mrf.mxu0
    %v331 = vadd.f32 %v267, %v330
    %332 = vdwg.mxu0
    %333 = vmatpush.msra.mxu0 0.0
    %334 = vmatpush.msra.mxu0 0.0
    %335 = vmatpush.msra.mxu0 0.0
    %336 = vmatpush.msra.mxu0 0.0
    %337 = vmatpush.msra.mxu0 0.0
    %338 = vmatpush.msra.mxu0 0.0
    %339 = vmatpush.msra.mxu0 0.0
    %340 = vmatpush.msra.mxu0 0.0
    %341 = vmatpush.msra.mxu0 0.0
    %342 = vmatpush.msra.mxu0 0.0
    %343 = vmatpush.msra.mxu0 0.0
    %344 = vmatpush.msra.mxu0 0.0
    %345 = vmatpush.msra.mxu0 0.0
    %346 = vmatpush.msra.mxu0 0.0
    %347 = vmatpush.msra.mxu0 0.0
    %v348 = vand.u32 %v29, 4294901760
    %349 = vmatpush.msra.mxu0 %v348
    %v350 = vand.u32 %v95, 4294901760
    %v351 = vsub.f32 %v95, %v350
    %v352 = vand.u32 %v351, 4294901760
    %353 = vmatmul.f32.gmra.mxu0 %v352
    %v354 = vpop.f32.mrf.mxu0
    %v355 = vadd.f32 %v291, %v354
    %v356 = vand.u32 %v98, 4294901760
    %v357 = vsub.f32 %v98, %v356
    %v358 = vand.u32 %v357, 4294901760
    %359 = vmatmul.f32.gmra.mxu0 %v358
    %v360 = vpop.f32.mrf.mxu0
    %v361 = vadd.f32 %v296, %v360
    %v362 = vand.u32 %v101, 4294901760
    %v363 = vsub.f32 %v101, %v362
    %v364 = vand.u32 %v363, 4294901760
    %365 = vmatmul.f32.gmra.mxu0 %v364
    %v366 = vpop.f32.mrf.mxu0
    %v367 = vadd.f32 %v301, %v366
    %v368 = vand.u32 %v104, 4294901760
    %v369 = vsub.f32 %v104, %v368
    %v370 = vand.u32 %v369, 4294901760
    %371 = vmatmul.f32.gmra.mxu0 %v370
    %v372 = vpop.f32.mrf.mxu0
    %v373 = vadd.f32 %v306, %v372
    %v374 = vand.u32 %v107, 4294901760
    %v375 = vsub.f32 %v107, %v374
    %v376 = vand.u32 %v375, 4294901760
    %377 = vmatmul.f32.gmra.mxu0 %v376
    %v378 = vpop.f32.mrf.mxu0
    %v379 = vadd.f32 %v311, %v378
    %v380 = vand.u32 %v110, 4294901760
    %v381 = vsub.f32 %v110, %v380
    %v382 = vand.u32 %v381, 4294901760
    %383 = vmatmul.f32.gmra.mxu0 %v382
    %v384 = vpop.f32.mrf.mxu0
    %v385 = vadd.f32 %v316, %v384
    %v386 = vand.u32 %v113, 4294901760
    %v387 = vsub.f32 %v113, %v386
    %v388 = vand.u32 %v387, 4294901760
    %389 = vmatmul.f32.gmra.mxu0 %v388
    %v390 = vpop.f32.mrf.mxu0
    %v391 = vadd.f32 %v321, %v390
    %v392 = vand.u32 %v116, 4294901760
    %v393 = vsub.f32 %v116, %v392
    %v394 = vand.u32 %v393, 4294901760
    %395 = vmatmul.f32.gmra.mxu0 %v394
    %v396 = vpop.f32.mrf.mxu0
    %v397 = vadd.f32 %v326, %v396
    %v398 = vand.u32 %v119, 4294901760
    %v399 = vsub.f32 %v119, %v398
    %v400 = vand.u32 %v399, 4294901760
    %401 = vmatmul.f32.gmra.mxu0 %v400
    %v402 = vpop.f32.mrf.mxu0
    %v403 = vadd.f32 %v331, %v402
    %404 = vdwg.mxu0
    %405 = vmatpush.msra.mxu0 0.0
    %406 = vmatpush.msra.mxu0 0.0
    %407 = vmatpush.msra.mxu0 0.0
    %408 = vmatpush.msra.mxu0 0.0
    %409 = vmatpush.msra.mxu0 0.0
    %410 = vmatpush.msra.mxu0 0.0
    %411 = vmatpush.msra.mxu0 0.0
    %412 = vmatpush.msra.mxu0 0.0
    %413 = vmatpush.msra.mxu0 0.0
    %414 = vmatpush.msra.mxu0 0.0
    %415 = vmatpush.msra.mxu0 0.0
    %416 = vmatpush.msra.mxu0 0.0
    %417 = vmatpush.msra.mxu0 0.0
    %418 = vmatpush.msra.mxu0 0.0
    %419 = vmatpush.msra.mxu0 0.0
    %v420 = vand.u32 %v29, 4294901760
    %v421 = vsub.f32 %v29, %v420
    %v422 = vand.u32 %v421, 4294901760
    %423 = vmatpush.msra.mxu0 %v422
    %v424 = vand.u32 %v95, 4294901760
    %425 = vmatmul.f32.gmra.mxu0 %v424
    %v426 = vpop.f32.mrf.mxu0
    %v427 = vadd.f32 %v355, %v426
    %v428 = vand.u32 %v98, 4294901760
    %429 = vmatmul.f32.gmra.mxu0 %v428
    %v430 = vpop.f32.mrf.mxu0
    %v431 = vadd.f32 %v361, %v430
    %v432 = vand.u32 %v101, 4294901760
    %433 = vmatmul.f32.gmra.mxu0 %v432
    %v434 = vpop.f32.mrf.mxu0
    %v435 = vadd.f32 %v367, %v434
    %v436 = vand.u32 %v104, 4294901760
    %437 = vmatmul.f32.gmra.mxu0 %v436
    %v438 = vpop.f32.mrf.mxu0
    %v439 = vadd.f32 %v373, %v438
    %v440 = vand.u32 %v107, 4294901760
    %441 = vmatmul.f32.gmra.mxu0 %v440
    %v442 = vpop.f32.mrf.mxu0
    %v443 = vadd.f32 %v379, %v442
    %v444 = vand.u32 %v110, 4294901760
    %445 = vmatmul.f32.gmra.mxu0 %v444
    %v446 = vpop.f32.mrf.mxu0
    %v447 = vadd.f32 %v385, %v446
    %v448 = vand.u32 %v113, 4294901760
    %449 = vmatmul.f32.gmra.mxu0 %v448
    %v450 = vpop.f32.mrf.mxu0
    %v451 = vadd.f32 %v391, %v450
    %v452 = vand.u32 %v116, 4294901760
    %453 = vmatmul.f32.gmra.mxu0 %v452
    %v454 = vpop.f32.mrf.mxu0
    %v455 = vadd.f32 %v397, %v454
    %v456 = vand.u32 %v119, 4294901760
    %457 = vmatmul.f32.gmra.mxu0 %v456
    %v458 = vpop.f32.mrf.mxu0
    %v459 = vadd.f32 %v403, %v458
    %460 = vdwg.mxu0
    %461 = vmatpush.msra.mxu0 0.0
    %462 = vmatpush.msra.mxu0 0.0
    %463 = vmatpush.msra.mxu0 0.0
    %464 = vmatpush.msra.mxu0 0.0
    %465 = vmatpush.msra.mxu0 0.0
    %466 = vmatpush.msra.mxu0 0.0
    %467 = vmatpush.msra.mxu0 0.0
    %468 = vmatpush.msra.mxu0 0.0
    %469 = vmatpush.msra.mxu0 0.0
    %470 = vmatpush.msra.mxu0 0.0
    %471 = vmatpush.msra.mxu0 0.0
    %472 = vmatpush.msra.mxu0 0.0
    %473 = vmatpush.msra.mxu0 0.0
    %474 = vmatpush.msra.mxu0 0.0
    %475 = vmatpush.msra.mxu0 0.0
    %v476 = vand.u32 %v29, 4294901760
    %477 = vmatpush.msra.mxu0 %v476
    %v478 = vand.u32 %v95, 4294901760
    %479 = vmatmul.f32.gmra.mxu0 %v478
    %v480 = vpop.f32.mrf.mxu0
    %v481 = vadd.f32 %v427, %v480
    %v482 = vand.u32 %v98, 4294901760
    %483 = vmatmul.f32.gmra.mxu0 %v482
    %v484 = vpop.f32.mrf.mxu0
    %v485 = vadd.f32 %v431, %v484
    %v486 = vand.u32 %v101, 4294901760
    %487 = vmatmul.f32.gmra.mxu0 %v486
    %v488 = vpop.f32.mrf.mxu0
    %v489 = vadd.f32 %v435, %v488
    %v490 = vand.u32 %v104, 4294901760
    %491 = vmatmul.f32.gmra.mxu0 %v490
    %v492 = vpop.f32.mrf.mxu0
    %v493 = vadd.f32 %v439, %v492
    %v494 = vand.u32 %v107, 4294901760
    %495 = vmatmul.f32.gmra.mxu0 %v494
    %v496 = vpop.f32.mrf.mxu0
    %v497 = vadd.f32 %v443, %v496
    %v498 = vand.u32 %v110, 4294901760
    %499 = vmatmul.f32.gmra.mxu0 %v498
    %v500 = vpop.f32.mrf.mxu0
    %v501 = vadd.f32 %v447, %v500
    %v502 = vand.u32 %v113, 4294901760
    %503 = vmatmul.f32.gmra.mxu0 %v502
    %v504 = vpop.f32.mrf.mxu0
    %v505 = vadd.f32 %v451, %v504
    %v506 = vand.u32 %v116, 4294901760
    %507 = vmatmul.f32.gmra.mxu0 %v506
    %v508 = vpop.f32.mrf.mxu0
    %v509 = vadd.f32 %v455, %v508
    %v510 = vand.u32 %v119, 4294901760
    %511 = vmatmul.f32.gmra.mxu0 %v510
    %v512 = vpop.f32.mrf.mxu0
    %v513 = vadd.f32 %v459, %v512
    %514 = vdwg.mxu0
    %v515 = vtanh.pop %v481
    %v516 = vtanh.pop %v485
    %v517 = vtanh.pop %v489
    %v518 = vtanh.pop %v493
    %v519 = vtanh.pop %v497
    %v520 = vtanh.pop %v501
    %v521 = vtanh.pop %v505
    %v522 = vtanh.pop %v509
    %v523 = vld [vmem:[%s1 + $0x48] sm:$0xff]
    %v524 = vld [vmem:[%s1 + $0x50] sm:$0xff]
    %v525 = vld [vmem:[%s1 + $0x58] sm:$0xff]
    %v526 = vld [vmem:[%s1 + $0x60] sm:$0xff]
    %v527 = vld [vmem:[%s1 + $0x68] sm:$0xff]
    %v528 = vld [vmem:[%s1 + $0x70] sm:$0xff]
    %v529 = vld [vmem:[%s1 + $0x78] sm:$0xff]
    %v530 = vld [vmem:[%s1 + $0x80] sm:$0xff]
    %v531 = vld [vmem:[%s2 + $0x48] sm:$0xff]
    %v532 = vld [vmem:[%s2 + $0x50] sm:$0xff]
    %v533 = vld [vmem:[%s2 + $0x58] sm:$0xff]
    %v534 = vld [vmem:[%s2 + $0x60] sm:$0xff]
    %v535 = vld [vmem:[%s2 + $0x68] sm:$0xff]
    %v536 = vld [vmem:[%s2 + $0x70] sm:$0xff]
    %v537 = vld [vmem:[%s2 + $0x78] sm:$0xff]
    %v538 = vld [vmem:[%s2 + $0x80] sm:$0xff]
    %540 = vset.pattern.permute.xlu0 0
    %541 = vperm.xlu0 %540, %v531
    %v542 = vpop.permute.xlu0 %541
    %545 = vset.pattern.permute.xlu0 0
    %546 = vperm.xlu0 %545, %v532
    %v547 = vpop.permute.xlu0 %546
    %550 = vset.pattern.permute.xlu0 0
    %551 = vperm.xlu0 %550, %v533
    %v552 = vpop.permute.xlu0 %551
    %555 = vset.pattern.permute.xlu0 0
    %556 = vperm.xlu0 %555, %v534
    %v557 = vpop.permute.xlu0 %556
    %560 = vset.pattern.permute.xlu0 0
    %561 = vperm.xlu0 %560, %v535
    %v562 = vpop.permute.xlu0 %561
    %565 = vset.pattern.permute.xlu0 0
    %566 = vperm.xlu0 %565, %v536
    %v567 = vpop.permute.xlu0 %566
    %570 = vset.pattern.permute.xlu0 0
    %571 = vperm.xlu0 %570, %v537
    %v572 = vpop.permute.xlu0 %571
    %575 = vset.pattern.permute.xlu0 0
    %576 = vperm.xlu0 %575, %v538
    %v577 = vpop.permute.xlu0 %576
    %vm579 = vcmask 523264
    %v581 = vsel %vm579, %v523, 0
    %v584 = vsel %vm579, %v524, 0
    %v587 = vsel %vm579, %v525, 0
    %v590 = vsel %vm579, %v526, 0
    %v593 = vsel %vm579, %v527, 0
    %v596 = vsel %vm579, %v528, 0
    %v599 = vsel %vm579, %v529, 0
    %v602 = vsel %vm579, %v530, 0
    %604 = vmatpush.msra.mxu0 0.0
    %605 = vmatpush.msra.mxu0 0.0
    %606 = vmatpush.msra.mxu0 0.0
    %607 = vmatpush.msra.mxu0 0.0
    %608 = vmatpush.msra.mxu0 0.0
    %609 = vmatpush.msra.mxu0 0.0
    %610 = vmatpush.msra.mxu0 0.0
    %611 = vmatpush.msra.mxu0 0.0
    %v612 = vand.u32 %v522, 4294901760
    %613 = vmatpush.msra.mxu0 %v612
    %v614 = vand.u32 %v521, 4294901760
    %615 = vmatpush.msra.mxu0 %v614
    %v616 = vand.u32 %v520, 4294901760
    %617 = vmatpush.msra.mxu0 %v616
    %v618 = vand.u32 %v519, 4294901760
    %619 = vmatpush.msra.mxu0 %v618
    %v620 = vand.u32 %v518, 4294901760
    %621 = vmatpush.msra.mxu0 %v620
    %v622 = vand.u32 %v517, 4294901760
    %623 = vmatpush.msra.mxu0 %v622
    %v624 = vand.u32 %v516, 4294901760
    %625 = vmatpush.msra.mxu0 %v624
    %v626 = vand.u32 %v515, 4294901760
    %627 = vmatpush.msra.mxu0 %v626
    %v628 = vand.u32 %v581, 4294901760
    %v629 = vsub.f32 %v581, %v628
    %v630 = vand.u32 %v629, 4294901760
    %v631 = vsub.f32 %v629, %v630
    %v632 = vand.u32 %v631, 4294901760
    %633 = vmatmul.f32.gmra.mxu0 %v632
    %v634 = vpop.f32.mrf.mxu0
    %v635 = vadd.f32 %v542, %v634
    %v636 = vand.u32 %v584, 4294901760
    %v637 = vsub.f32 %v584, %v636
    %v638 = vand.u32 %v637, 4294901760
    %v639 = vsub.f32 %v637, %v638
    %v640 = vand.u32 %v639, 4294901760
    %641 = vmatmul.f32.gmra.mxu0 %v640
    %v642 = vpop.f32.mrf.mxu0
    %v643 = vadd.f32 %v547, %v642
    %v644 = vand.u32 %v587, 4294901760
    %v645 = vsub.f32 %v587, %v644
    %v646 = vand.u32 %v645, 4294901760
    %v647 = vsub.f32 %v645, %v646
    %v648 = vand.u32 %v647, 4294901760
    %649 = vmatmul.f32.gmra.mxu0 %v648
    %v650 = vpop.f32.mrf.mxu0
    %v651 = vadd.f32 %v552, %v650
    %v652 = vand.u32 %v590, 4294901760
    %v653 = vsub.f32 %v590, %v652
    %v654 = vand.u32 %v653, 4294901760
    %v655 = vsub.f32 %v653, %v654
    %v656 = vand.u32 %v655, 4294901760
    %657 = vmatmul.f32.gmra.mxu0 %v656
    %v658 = vpop.f32.mrf.mxu0
    %v659 = vadd.f32 %v557, %v658
    %v660 = vand.u32 %v593, 4294901760
    %v661 = vsub.f32 %v593, %v660
    %v662 = vand.u32 %v661, 4294901760
    %v663 = vsub.f32 %v661, %v662
    %v664 = vand.u32 %v663, 4294901760
    %665 = vmatmul.f32.gmra.mxu0 %v664
    %v666 = vpop.f32.mrf.mxu0
    %v667 = vadd.f32 %v562, %v666
    %v668 = vand.u32 %v596, 4294901760
    %v669 = vsub.f32 %v596, %v668
    %v670 = vand.u32 %v669, 4294901760
    %v671 = vsub.f32 %v669, %v670
    %v672 = vand.u32 %v671, 4294901760
    %673 = vmatmul.f32.gmra.mxu0 %v672
    %v674 = vpop.f32.mrf.mxu0
    %v675 = vadd.f32 %v567, %v674
    %v676 = vand.u32 %v599, 4294901760
    %v677 = vsub.f32 %v599, %v676
    %v678 = vand.u32 %v677, 4294901760
    %v679 = vsub.f32 %v677, %v678
    %v680 = vand.u32 %v679, 4294901760
    %681 = vmatmul.f32.gmra.mxu0 %v680
    %v682 = vpop.f32.mrf.mxu0
    %v683 = vadd.f32 %v572, %v682
    %v684 = vand.u32 %v602, 4294901760
    %v685 = vsub.f32 %v602, %v684
    %v686 = vand.u32 %v685, 4294901760
    %v687 = vsub.f32 %v685, %v686
    %v688 = vand.u32 %v687, 4294901760
    %689 = vmatmul.f32.gmra.mxu0 %v688
    %v690 = vpop.f32.mrf.mxu0
    %v691 = vadd.f32 %v577, %v690
    %692 = vdwg.mxu0
    %693 = vmatpush.msra.mxu0 0.0
    %694 = vmatpush.msra.mxu0 0.0
    %695 = vmatpush.msra.mxu0 0.0
    %696 = vmatpush.msra.mxu0 0.0
    %697 = vmatpush.msra.mxu0 0.0
    %698 = vmatpush.msra.mxu0 0.0
    %699 = vmatpush.msra.mxu0 0.0
    %700 = vmatpush.msra.mxu0 0.0
    %v701 = vand.u32 %v522, 4294901760
    %v702 = vsub.f32 %v522, %v701
    %v703 = vand.u32 %v702, 4294901760
    %v704 = vsub.f32 %v702, %v703
    %v705 = vand.u32 %v704, 4294901760
    %706 = vmatpush.msra.mxu0 %v705
    %v707 = vand.u32 %v521, 4294901760
    %v708 = vsub.f32 %v521, %v707
    %v709 = vand.u32 %v708, 4294901760
    %v710 = vsub.f32 %v708, %v709
    %v711 = vand.u32 %v710, 4294901760
    %712 = vmatpush.msra.mxu0 %v711
    %v713 = vand.u32 %v520, 4294901760
    %v714 = vsub.f32 %v520, %v713
    %v715 = vand.u32 %v714, 4294901760
    %v716 = vsub.f32 %v714, %v715
    %v717 = vand.u32 %v716, 4294901760
    %718 = vmatpush.msra.mxu0 %v717
    %v719 = vand.u32 %v519, 4294901760
    %v720 = vsub.f32 %v519, %v719
    %v721 = vand.u32 %v720, 4294901760
    %v722 = vsub.f32 %v720, %v721
    %v723 = vand.u32 %v722, 4294901760
    %724 = vmatpush.msra.mxu0 %v723
    %v725 = vand.u32 %v518, 4294901760
    %v726 = vsub.f32 %v518, %v725
    %v727 = vand.u32 %v726, 4294901760
    %v728 = vsub.f32 %v726, %v727
    %v729 = vand.u32 %v728, 4294901760
    %730 = vmatpush.msra.mxu0 %v729
    %v731 = vand.u32 %v517, 4294901760
    %v732 = vsub.f32 %v517, %v731
    %v733 = vand.u32 %v732, 4294901760
    %v734 = vsub.f32 %v732, %v733
    %v735 = vand.u32 %v734, 4294901760
    %736 = vmatpush.msra.mxu0 %v735
    %v737 = vand.u32 %v516, 4294901760
    %v738 = vsub.f32 %v516, %v737
    %v739 = vand.u32 %v738, 4294901760
    %v740 = vsub.f32 %v738, %v739
    %v741 = vand.u32 %v740, 4294901760
    %742 = vmatpush.msra.mxu0 %v741
    %v743 = vand.u32 %v515, 4294901760
    %v744 = vsub.f32 %v515, %v743
    %v745 = vand.u32 %v744, 4294901760
    %v746 = vsub.f32 %v744, %v745
    %v747 = vand.u32 %v746, 4294901760
    %748 = vmatpush.msra.mxu0 %v747
    %v749 = vand.u32 %v581, 4294901760
    %750 = vmatmul.f32.gmra.mxu0 %v749
    %v751 = vpop.f32.mrf.mxu0
    %v752 = vadd.f32 %v635, %v751
    %v753 = vand.u32 %v584, 4294901760
    %754 = vmatmul.f32.gmra.mxu0 %v753
    %v755 = vpop.f32.mrf.mxu0
    %v756 = vadd.f32 %v643, %v755
    %v757 = vand.u32 %v587, 4294901760
    %758 = vmatmul.f32.gmra.mxu0 %v757
    %v759 = vpop.f32.mrf.mxu0
    %v760 = vadd.f32 %v651, %v759
    %v761 = vand.u32 %v590, 4294901760
    %762 = vmatmul.f32.gmra.mxu0 %v761
    %v763 = vpop.f32.mrf.mxu0
    %v764 = vadd.f32 %v659, %v763
    %v765 = vand.u32 %v593, 4294901760
    %766 = vmatmul.f32.gmra.mxu0 %v765
    %v767 = vpop.f32.mrf.mxu0
    %v768 = vadd.f32 %v667, %v767
    %v769 = vand.u32 %v596, 4294901760
    %770 = vmatmul.f32.gmra.mxu0 %v769
    %v771 = vpop.f32.mrf.mxu0
    %v772 = vadd.f32 %v675, %v771
    %v773 = vand.u32 %v599, 4294901760
    %774 = vmatmul.f32.gmra.mxu0 %v773
    %v775 = vpop.f32.mrf.mxu0
    %v776 = vadd.f32 %v683, %v775
    %v777 = vand.u32 %v602, 4294901760
    %778 = vmatmul.f32.gmra.mxu0 %v777
    %v779 = vpop.f32.mrf.mxu0
    %v780 = vadd.f32 %v691, %v779
    %781 = vdwg.mxu0
    %782 = vmatpush.msra.mxu0 0.0
    %783 = vmatpush.msra.mxu0 0.0
    %784 = vmatpush.msra.mxu0 0.0
    %785 = vmatpush.msra.mxu0 0.0
    %786 = vmatpush.msra.mxu0 0.0
    %787 = vmatpush.msra.mxu0 0.0
    %788 = vmatpush.msra.mxu0 0.0
    %789 = vmatpush.msra.mxu0 0.0
    %v790 = vand.u32 %v522, 4294901760
    %v791 = vsub.f32 %v522, %v790
    %792 = vmatpush.msra.mxu0 %v791
    %v793 = vand.u32 %v521, 4294901760
    %v794 = vsub.f32 %v521, %v793
    %795 = vmatpush.msra.mxu0 %v794
    %v796 = vand.u32 %v520, 4294901760
    %v797 = vsub.f32 %v520, %v796
    %798 = vmatpush.msra.mxu0 %v797
    %v799 = vand.u32 %v519, 4294901760
    %v800 = vsub.f32 %v519, %v799
    %801 = vmatpush.msra.mxu0 %v800
    %v802 = vand.u32 %v518, 4294901760
    %v803 = vsub.f32 %v518, %v802
    %804 = vmatpush.msra.mxu0 %v803
    %v805 = vand.u32 %v517, 4294901760
    %v806 = vsub.f32 %v517, %v805
    %807 = vmatpush.msra.mxu0 %v806
    %v808 = vand.u32 %v516, 4294901760
    %v809 = vsub.f32 %v516, %v808
    %810 = vmatpush.msra.mxu0 %v809
    %v811 = vand.u32 %v515, 4294901760
    %v812 = vsub.f32 %v515, %v811
    %813 = vmatpush.msra.mxu0 %v812
    %v814 = vand.u32 %v581, 4294901760
    %v815 = vsub.f32 %v581, %v814
    %816 = vmatmul.f32.gmra.mxu0 %v815
    %v817 = vpop.f32.mrf.mxu0
    %v818 = vadd.f32 %v752, %v817
    %v819 = vand.u32 %v584, 4294901760
    %v820 = vsub.f32 %v584, %v819
    %821 = vmatmul.f32.gmra.mxu0 %v820
    %v822 = vpop.f32.mrf.mxu0
    %v823 = vadd.f32 %v756, %v822
    %v824 = vand.u32 %v587, 4294901760
    %v825 = vsub.f32 %v587, %v824
    %826 = vmatmul.f32.gmra.mxu0 %v825
    %v827 = vpop.f32.mrf.mxu0
    %v828 = vadd.f32 %v760, %v827
    %v829 = vand.u32 %v590, 4294901760
    %v830 = vsub.f32 %v590, %v829
    %831 = vmatmul.f32.gmra.mxu0 %v830
    %v832 = vpop.f32.mrf.mxu0
    %v833 = vadd.f32 %v764, %v832
    %v834 = vand.u32 %v593, 4294901760
    %v835 = vsub.f32 %v593, %v834
    %836 = vmatmul.f32.gmra.mxu0 %v835
    %v837 = vpop.f32.mrf.mxu0
    %v838 = vadd.f32 %v768, %v837
    %v839 = vand.u32 %v596, 4294901760
    %v840 = vsub.f32 %v596, %v839
    %841 = vmatmul.f32.gmra.mxu0 %v840
    %v842 = vpop.f32.mrf.mxu0
    %v843 = vadd.f32 %v772, %v842
    %v844 = vand.u32 %v599, 4294901760
    %v845 = vsub.f32 %v599, %v844
    %846 = vmatmul.f32.gmra.mxu0 %v845
    %v847 = vpop.f32.mrf.mxu0
    %v848 = vadd.f32 %v776, %v847
    %v849 = vand.u32 %v602, 4294901760
    %v850 = vsub.f32 %v602, %v849
    %851 = vmatmul.f32.gmra.mxu0 %v850
    %v852 = vpop.f32.mrf.mxu0
    %v853 = vadd.f32 %v780, %v852
    %854 = vdwg.mxu0
    %855 = vmatpush.msra.mxu0 0.0
    %856 = vmatpush.msra.mxu0 0.0
    %857 = vmatpush.msra.mxu0 0.0
    %858 = vmatpush.msra.mxu0 0.0
    %859 = vmatpush.msra.mxu0 0.0
    %860 = vmatpush.msra.mxu0 0.0
    %861 = vmatpush.msra.mxu0 0.0
    %862 = vmatpush.msra.mxu0 0.0
    %v863 = vand.u32 %v522, 4294901760
    %864 = vmatpush.msra.mxu0 %v863
    %v865 = vand.u32 %v521, 4294901760
    %866 = vmatpush.msra.mxu0 %v865
    %v867 = vand.u32 %v520, 4294901760
    %868 = vmatpush.msra.mxu0 %v867
    %v869 = vand.u32 %v519, 4294901760
    %870 = vmatpush.msra.mxu0 %v869
    %v871 = vand.u32 %v518, 4294901760
    %872 = vmatpush.msra.mxu0 %v871
    %v873 = vand.u32 %v517, 4294901760
    %874 = vmatpush.msra.mxu0 %v873
    %v875 = vand.u32 %v516, 4294901760
    %876 = vmatpush.msra.mxu0 %v875
    %v877 = vand.u32 %v515, 4294901760
    %878 = vmatpush.msra.mxu0 %v877
    %v879 = vand.u32 %v581, 4294901760
    %v880 = vsub.f32 %v581, %v879
    %v881 = vand.u32 %v880, 4294901760
    %882 = vmatmul.f32.gmra.mxu0 %v881
    %v883 = vpop.f32.mrf.mxu0
    %v884 = vadd.f32 %v818, %v883
    %v885 = vand.u32 %v584, 4294901760
    %v886 = vsub.f32 %v584, %v885
    %v887 = vand.u32 %v886, 4294901760
    %888 = vmatmul.f32.gmra.mxu0 %v887
    %v889 = vpop.f32.mrf.mxu0
    %v890 = vadd.f32 %v823, %v889
    %v891 = vand.u32 %v587, 4294901760
    %v892 = vsub.f32 %v587, %v891
    %v893 = vand.u32 %v892, 4294901760
    %894 = vmatmul.f32.gmra.mxu0 %v893
    %v895 = vpop.f32.mrf.mxu0
    %v896 = vadd.f32 %v828, %v895
    %v897 = vand.u32 %v590, 4294901760
    %v898 = vsub.f32 %v590, %v897
    %v899 = vand.u32 %v898, 4294901760
    %900 = vmatmul.f32.gmra.mxu0 %v899
    %v901 = vpop.f32.mrf.mxu0
    %v902 = vadd.f32 %v833, %v901
    %v903 = vand.u32 %v593, 4294901760
    %v904 = vsub.f32 %v593, %v903
    %v905 = vand.u32 %v904, 4294901760
    %906 = vmatmul.f32.gmra.mxu0 %v905
    %v907 = vpop.f32.mrf.mxu0
    %v908 = vadd.f32 %v838, %v907
    %v909 = vand.u32 %v596, 4294901760
    %v910 = vsub.f32 %v596, %v909
    %v911 = vand.u32 %v910, 4294901760
    %912 = vmatmul.f32.gmra.mxu0 %v911
    %v913 = vpop.f32.mrf.mxu0
    %v914 = vadd.f32 %v843, %v913
    %v915 = vand.u32 %v599, 4294901760
    %v916 = vsub.f32 %v599, %v915
    %v917 = vand.u32 %v916, 4294901760
    %918 = vmatmul.f32.gmra.mxu0 %v917
    %v919 = vpop.f32.mrf.mxu0
    %v920 = vadd.f32 %v848, %v919
    %v921 = vand.u32 %v602, 4294901760
    %v922 = vsub.f32 %v602, %v921
    %v923 = vand.u32 %v922, 4294901760
    %924 = vmatmul.f32.gmra.mxu0 %v923
    %v925 = vpop.f32.mrf.mxu0
    %v926 = vadd.f32 %v853, %v925
    %927 = vdwg.mxu0
    %928 = vmatpush.msra.mxu0 0.0
    %929 = vmatpush.msra.mxu0 0.0
    %930 = vmatpush.msra.mxu0 0.0
    %931 = vmatpush.msra.mxu0 0.0
    %932 = vmatpush.msra.mxu0 0.0
    %933 = vmatpush.msra.mxu0 0.0
    %934 = vmatpush.msra.mxu0 0.0
    %935 = vmatpush.msra.mxu0 0.0
    %v936 = vand.u32 %v522, 4294901760
    %v937 = vsub.f32 %v522, %v936
    %v938 = vand.u32 %v937, 4294901760
    %939 = vmatpush.msra.mxu0 %v938
    %v940 = vand.u32 %v521, 4294901760
    %v941 = vsub.f32 %v521, %v940
    %v942 = vand.u32 %v941, 4294901760
    %943 = vmatpush.msra.mxu0 %v942
    %v944 = vand.u32 %v520, 4294901760
    %v945 = vsub.f32 %v520, %v944
    %v946 = vand.u32 %v945, 4294901760
    %947 = vmatpush.msra.mxu0 %v946
    %v948 = vand.u32 %v519, 4294901760
    %v949 = vsub.f32 %v519, %v948
    %v950 = vand.u32 %v949, 4294901760
    %951 = vmatpush.msra.mxu0 %v950
    %v952 = vand.u32 %v518, 4294901760
    %v953 = vsub.f32 %v518, %v952
    %v954 = vand.u32 %v953, 4294901760
    %955 = vmatpush.msra.mxu0 %v954
    %v956 = vand.u32 %v517, 4294901760
    %v957 = vsub.f32 %v517, %v956
    %v958 = vand.u32 %v957, 4294901760
    %959 = vmatpush.msra.mxu0 %v958
    %v960 = vand.u32 %v516, 4294901760
    %v961 = vsub.f32 %v516, %v960
    %v962 = vand.u32 %v961, 4294901760
    %963 = vmatpush.msra.mxu0 %v962
    %v964 = vand.u32 %v515, 4294901760
    %v965 = vsub.f32 %v515, %v964
    %v966 = vand.u32 %v965, 4294901760
    %967 = vmatpush.msra.mxu0 %v966
    %v968 = vand.u32 %v581, 4294901760
    %969 = vmatmul.f32.gmra.mxu0 %v968
    %v970 = vpop.f32.mrf.mxu0
    %v971 = vadd.f32 %v884, %v970
    %v972 = vand.u32 %v584, 4294901760
    %973 = vmatmul.f32.gmra.mxu0 %v972
    %v974 = vpop.f32.mrf.mxu0
    %v975 = vadd.f32 %v890, %v974
    %v976 = vand.u32 %v587, 4294901760
    %977 = vmatmul.f32.gmra.mxu0 %v976
    %v978 = vpop.f32.mrf.mxu0
    %v979 = vadd.f32 %v896, %v978
    %v980 = vand.u32 %v590, 4294901760
    %981 = vmatmul.f32.gmra.mxu0 %v980
    %v982 = vpop.f32.mrf.mxu0
    %v983 = vadd.f32 %v902, %v982
    %v984 = vand.u32 %v593, 4294901760
    %985 = vmatmul.f32.gmra.mxu0 %v984
    %v986 = vpop.f32.mrf.mxu0
    %v987 = vadd.f32 %v908, %v986
    %v988 = vand.u32 %v596, 4294901760
    %989 = vmatmul.f32.gmra.mxu0 %v988
    %v990 = vpop.f32.mrf.mxu0
    %v991 = vadd.f32 %v914, %v990
    %v992 = vand.u32 %v599, 4294901760
    %993 = vmatmul.f32.gmra.mxu0 %v992
    %v994 = vpop.f32.mrf.mxu0
    %v995 = vadd.f32 %v920, %v994
    %v996 = vand.u32 %v602, 4294901760
    %997 = vmatmul.f32.gmra.mxu0 %v996
    %v998 = vpop.f32.mrf.mxu0
    %v999 = vadd.f32 %v926, %v998
    %1000 = vdwg.mxu0
    %1001 = vmatpush.msra.mxu0 0.0
    %1002 = vmatpush.msra.mxu0 0.0
    %1003 = vmatpush.msra.mxu0 0.0
    %1004 = vmatpush.msra.mxu0 0.0
    %1005 = vmatpush.msra.mxu0 0.0
    %1006 = vmatpush.msra.mxu0 0.0
    %1007 = vmatpush.msra.mxu0 0.0
    %1008 = vmatpush.msra.mxu0 0.0
    %v1009 = vand.u32 %v522, 4294901760
    %1010 = vmatpush.msra.mxu0 %v1009
    %v1011 = vand.u32 %v521, 4294901760
    %1012 = vmatpush.msra.mxu0 %v1011
    %v1013 = vand.u32 %v520, 4294901760
    %1014 = vmatpush.msra.mxu0 %v1013
    %v1015 = vand.u32 %v519, 4294901760
    %1016 = vmatpush.msra.mxu0 %v1015
    %v1017 = vand.u32 %v518, 4294901760
    %1018 = vmatpush.msra.mxu0 %v1017
    %v1019 = vand.u32 %v517, 4294901760
    %1020 = vmatpush.msra.mxu0 %v1019
    %v1021 = vand.u32 %v516, 4294901760
    %1022 = vmatpush.msra.mxu0 %v1021
    %v1023 = vand.u32 %v515, 4294901760
    %1024 = vmatpush.msra.mxu0 %v1023
    %v1025 = vand.u32 %v581, 4294901760
    %1026 = vmatmul.f32.gmra.mxu0 %v1025
    %v1027 = vpop.f32.mrf.mxu0
    %v1028 = vadd.f32 %v971, %v1027
    %v1029 = vand.u32 %v584, 4294901760
    %1030 = vmatmul.f32.gmra.mxu0 %v1029
    %v1031 = vpop.f32.mrf.mxu0
    %v1032 = vadd.f32 %v975, %v1031
    %v1033 = vand.u32 %v587, 4294901760
    %1034 = vmatmul.f32.gmra.mxu0 %v1033
    %v1035 = vpop.f32.mrf.mxu0
    %v1036 = vadd.f32 %v979, %v1035
    %v1037 = vand.u32 %v590, 4294901760
    %1038 = vmatmul.f32.gmra.mxu0 %v1037
    %v1039 = vpop.f32.mrf.mxu0
    %v1040 = vadd.f32 %v983, %v1039
    %v1041 = vand.u32 %v593, 4294901760
    %1042 = vmatmul.f32.gmra.mxu0 %v1041
    %v1043 = vpop.f32.mrf.mxu0
    %v1044 = vadd.f32 %v987, %v1043
    %v1045 = vand.u32 %v596, 4294901760
    %1046 = vmatmul.f32.gmra.mxu0 %v1045
    %v1047 = vpop.f32.mrf.mxu0
    %v1048 = vadd.f32 %v991, %v1047
    %v1049 = vand.u32 %v599, 4294901760
    %1050 = vmatmul.f32.gmra.mxu0 %v1049
    %v1051 = vpop.f32.mrf.mxu0
    %v1052 = vadd.f32 %v995, %v1051
    %v1053 = vand.u32 %v602, 4294901760
    %1054 = vmatmul.f32.gmra.mxu0 %v1053
    %v1055 = vpop.f32.mrf.mxu0
    %v1056 = vadd.f32 %v999, %v1055
    %1057 = vdwg.mxu0
    %v1058 = vtanh.pop %v1028
    %v1059 = vtanh.pop %v1032
    %v1060 = vtanh.pop %v1036
    %v1061 = vtanh.pop %v1040
    %v1062 = vtanh.pop %v1044
    %v1063 = vtanh.pop %v1048
    %v1064 = vtanh.pop %v1052
    %v1065 = vtanh.pop %v1056
    %v1066 = vld [vmem:[%s1 + $0x88] sm:$0xff]
    %v1067 = vld [vmem:[%s2 + $0x88] sm:$0xff]
    %1069 = vset.pattern.permute.xlu0 0
    %1070 = vperm.xlu0 %1069, %v1067
    %v1071 = vpop.permute.xlu0 %1070
    %v1074 = vsel %vm579, %v1066, 0
    %1076 = vmatpush.msra.mxu0 0.0
    %1077 = vmatpush.msra.mxu0 0.0
    %1078 = vmatpush.msra.mxu0 0.0
    %1079 = vmatpush.msra.mxu0 0.0
    %1080 = vmatpush.msra.mxu0 0.0
    %1081 = vmatpush.msra.mxu0 0.0
    %1082 = vmatpush.msra.mxu0 0.0
    %1083 = vmatpush.msra.mxu0 0.0
    %v1084 = vand.u32 %v1065, 4294901760
    %1085 = vmatpush.msra.mxu0 %v1084
    %v1086 = vand.u32 %v1064, 4294901760
    %1087 = vmatpush.msra.mxu0 %v1086
    %v1088 = vand.u32 %v1063, 4294901760
    %1089 = vmatpush.msra.mxu0 %v1088
    %v1090 = vand.u32 %v1062, 4294901760
    %1091 = vmatpush.msra.mxu0 %v1090
    %v1092 = vand.u32 %v1061, 4294901760
    %1093 = vmatpush.msra.mxu0 %v1092
    %v1094 = vand.u32 %v1060, 4294901760
    %1095 = vmatpush.msra.mxu0 %v1094
    %v1096 = vand.u32 %v1059, 4294901760
    %1097 = vmatpush.msra.mxu0 %v1096
    %v1098 = vand.u32 %v1058, 4294901760
    %1099 = vmatpush.msra.mxu0 %v1098
    %v1100 = vand.u32 %v1074, 4294901760
    %v1101 = vsub.f32 %v1074, %v1100
    %v1102 = vand.u32 %v1101, 4294901760
    %v1103 = vsub.f32 %v1101, %v1102
    %v1104 = vand.u32 %v1103, 4294901760
    %1105 = vmatmul.f32.gmra.mxu0 %v1104
    %v1106 = vpop.f32.mrf.mxu0
    %v1107 = vadd.f32 %v1071, %v1106
    %1108 = vdwg.mxu0
    %1109 = vmatpush.msra.mxu0 0.0
    %1110 = vmatpush.msra.mxu0 0.0
    %1111 = vmatpush.msra.mxu0 0.0
    %1112 = vmatpush.msra.mxu0 0.0
    %1113 = vmatpush.msra.mxu0 0.0
    %1114 = vmatpush.msra.mxu0 0.0
    %1115 = vmatpush.msra.mxu0 0.0
    %1116 = vmatpush.msra.mxu0 0.0
    %v1117 = vand.u32 %v1065, 4294901760
    %v1118 = vsub.f32 %v1065, %v1117
    %v1119 = vand.u32 %v1118, 4294901760
    %v1120 = vsub.f32 %v1118, %v1119
    %v1121 = vand.u32 %v1120, 4294901760
    %1122 = vmatpush.msra.mxu0 %v1121
    %v1123 = vand.u32 %v1064, 4294901760
    %v1124 = vsub.f32 %v1064, %v1123
    %v1125 = vand.u32 %v1124, 4294901760
    %v1126 = vsub.f32 %v1124, %v1125
    %v1127 = vand.u32 %v1126, 4294901760
    %1128 = vmatpush.msra.mxu0 %v1127
    %v1129 = vand.u32 %v1063, 4294901760
    %v1130 = vsub.f32 %v1063, %v1129
    %v1131 = vand.u32 %v1130, 4294901760
    %v1132 = vsub.f32 %v1130, %v1131
    %v1133 = vand.u32 %v1132, 4294901760
    %1134 = vmatpush.msra.mxu0 %v1133
    %v1135 = vand.u32 %v1062, 4294901760
    %v1136 = vsub.f32 %v1062, %v1135
    %v1137 = vand.u32 %v1136, 4294901760
    %v1138 = vsub.f32 %v1136, %v1137
    %v1139 = vand.u32 %v1138, 4294901760
    %1140 = vmatpush.msra.mxu0 %v1139
    %v1141 = vand.u32 %v1061, 4294901760
    %v1142 = vsub.f32 %v1061, %v1141
    %v1143 = vand.u32 %v1142, 4294901760
    %v1144 = vsub.f32 %v1142, %v1143
    %v1145 = vand.u32 %v1144, 4294901760
    %1146 = vmatpush.msra.mxu0 %v1145
    %v1147 = vand.u32 %v1060, 4294901760
    %v1148 = vsub.f32 %v1060, %v1147
    %v1149 = vand.u32 %v1148, 4294901760
    %v1150 = vsub.f32 %v1148, %v1149
    %v1151 = vand.u32 %v1150, 4294901760
    %1152 = vmatpush.msra.mxu0 %v1151
    %v1153 = vand.u32 %v1059, 4294901760
    %v1154 = vsub.f32 %v1059, %v1153
    %v1155 = vand.u32 %v1154, 4294901760
    %v1156 = vsub.f32 %v1154, %v1155
    %v1157 = vand.u32 %v1156, 4294901760
    %1158 = vmatpush.msra.mxu0 %v1157
    %v1159 = vand.u32 %v1058, 4294901760
    %v1160 = vsub.f32 %v1058, %v1159
    %v1161 = vand.u32 %v1160, 4294901760
    %v1162 = vsub.f32 %v1160, %v1161
    %v1163 = vand.u32 %v1162, 4294901760
    %1164 = vmatpush.msra.mxu0 %v1163
    %v1165 = vand.u32 %v1074, 4294901760
    %1166 = vmatmul.f32.gmra.mxu0 %v1165
    %v1167 = vpop.f32.mrf.mxu0
    %v1168 = vadd.f32 %v1107, %v1167
    %1169 = vdwg.mxu0
    %1170 = vmatpush.msra.mxu0 0.0
    %1171 = vmatpush.msra.mxu0 0.0
    %1172 = vmatpush.msra.mxu0 0.0
    %1173 = vmatpush.msra.mxu0 0.0
    %1174 = vmatpush.msra.mxu0 0.0
    %1175 = vmatpush.msra.mxu0 0.0
    %1176 = vmatpush.msra.mxu0 0.0
    %1177 = vmatpush.msra.mxu0 0.0
    %v1178 = vand.u32 %v1065, 4294901760
    %v1179 = vsub.f32 %v1065, %v1178
    %1180 = vmatpush.msra.mxu0 %v1179
    %v1181 = vand.u32 %v1064, 4294901760
    %v1182 = vsub.f32 %v1064, %v1181
    %1183 = vmatpush.msra.mxu0 %v1182
    %v1184 = vand.u32 %v1063, 4294901760
    %v1185 = vsub.f32 %v1063, %v1184
    %1186 = vmatpush.msra.mxu0 %v1185
    %v1187 = vand.u32 %v1062, 4294901760
    %v1188 = vsub.f32 %v1062, %v1187
    %1189 = vmatpush.msra.mxu0 %v1188
    %v1190 = vand.u32 %v1061, 4294901760
    %v1191 = vsub.f32 %v1061, %v1190
    %1192 = vmatpush.msra.mxu0 %v1191
    %v1193 = vand.u32 %v1060, 4294901760
    %v1194 = vsub.f32 %v1060, %v1193
    %1195 = vmatpush.msra.mxu0 %v1194
    %v1196 = vand.u32 %v1059, 4294901760
    %v1197 = vsub.f32 %v1059, %v1196
    %1198 = vmatpush.msra.mxu0 %v1197
    %v1199 = vand.u32 %v1058, 4294901760
    %v1200 = vsub.f32 %v1058, %v1199
    %1201 = vmatpush.msra.mxu0 %v1200
    %v1202 = vand.u32 %v1074, 4294901760
    %v1203 = vsub.f32 %v1074, %v1202
    %1204 = vmatmul.f32.gmra.mxu0 %v1203
    %v1205 = vpop.f32.mrf.mxu0
    %v1206 = vadd.f32 %v1168, %v1205
    %1207 = vdwg.mxu0
    %1208 = vmatpush.msra.mxu0 0.0
    %1209 = vmatpush.msra.mxu0 0.0
    %1210 = vmatpush.msra.mxu0 0.0
    %1211 = vmatpush.msra.mxu0 0.0
    %1212 = vmatpush.msra.mxu0 0.0
    %1213 = vmatpush.msra.mxu0 0.0
    %1214 = vmatpush.msra.mxu0 0.0
    %1215 = vmatpush.msra.mxu0 0.0
    %v1216 = vand.u32 %v1065, 4294901760
    %1217 = vmatpush.msra.mxu0 %v1216
    %v1218 = vand.u32 %v1064, 4294901760
    %1219 = vmatpush.msra.mxu0 %v1218
    %v1220 = vand.u32 %v1063, 4294901760
    %1221 = vmatpush.msra.mxu0 %v1220
    %v1222 = vand.u32 %v1062, 4294901760
    %1223 = vmatpush.msra.mxu0 %v1222
    %v1224 = vand.u32 %v1061, 4294901760
    %1225 = vmatpush.msra.mxu0 %v1224
    %v1226 = vand.u32 %v1060, 4294901760
    %1227 = vmatpush.msra.mxu0 %v1226
    %v1228 = vand.u32 %v1059, 4294901760
    %1229 = vmatpush.msra.mxu0 %v1228
    %v1230 = vand.u32 %v1058, 4294901760
    %1231 = vmatpush.msra.mxu0 %v1230
    %v1232 = vand.u32 %v1074, 4294901760
    %v1233 = vsub.f32 %v1074, %v1232
    %v1234 = vand.u32 %v1233, 4294901760
    %1235 = vmatmul.f32.gmra.mxu0 %v1234
    %v1236 = vpop.f32.mrf.mxu0
    %v1237 = vadd.f32 %v1206, %v1236
    %1238 = vdwg.mxu0
    %1239 = vmatpush.msra.mxu0 0.0
    %1240 = vmatpush.msra.mxu0 0.0
    %1241 = vmatpush.msra.mxu0 0.0
    %1242 = vmatpush.msra.mxu0 0.0
    %1243 = vmatpush.msra.mxu0 0.0
    %1244 = vmatpush.msra.mxu0 0.0
    %1245 = vmatpush.msra.mxu0 0.0
    %1246 = vmatpush.msra.mxu0 0.0
    %v1247 = vand.u32 %v1065, 4294901760
    %v1248 = vsub.f32 %v1065, %v1247
    %v1249 = vand.u32 %v1248, 4294901760
    %1250 = vmatpush.msra.mxu0 %v1249
    %v1251 = vand.u32 %v1064, 4294901760
    %v1252 = vsub.f32 %v1064, %v1251
    %v1253 = vand.u32 %v1252, 4294901760
    %1254 = vmatpush.msra.mxu0 %v1253
    %v1255 = vand.u32 %v1063, 4294901760
    %v1256 = vsub.f32 %v1063, %v1255
    %v1257 = vand.u32 %v1256, 4294901760
    %1258 = vmatpush.msra.mxu0 %v1257
    %v1259 = vand.u32 %v1062, 4294901760
    %v1260 = vsub.f32 %v1062, %v1259
    %v1261 = vand.u32 %v1260, 4294901760
    %1262 = vmatpush.msra.mxu0 %v1261
    %v1263 = vand.u32 %v1061, 4294901760
    %v1264 = vsub.f32 %v1061, %v1263
    %v1265 = vand.u32 %v1264, 4294901760
    %1266 = vmatpush.msra.mxu0 %v1265
    %v1267 = vand.u32 %v1060, 4294901760
    %v1268 = vsub.f32 %v1060, %v1267
    %v1269 = vand.u32 %v1268, 4294901760
    %1270 = vmatpush.msra.mxu0 %v1269
    %v1271 = vand.u32 %v1059, 4294901760
    %v1272 = vsub.f32 %v1059, %v1271
    %v1273 = vand.u32 %v1272, 4294901760
    %1274 = vmatpush.msra.mxu0 %v1273
    %v1275 = vand.u32 %v1058, 4294901760
    %v1276 = vsub.f32 %v1058, %v1275
    %v1277 = vand.u32 %v1276, 4294901760
    %1278 = vmatpush.msra.mxu0 %v1277
    %v1279 = vand.u32 %v1074, 4294901760
    %1280 = vmatmul.f32.gmra.mxu0 %v1279
    %v1281 = vpop.f32.mrf.mxu0
    %v1282 = vadd.f32 %v1237, %v1281
    %1283 = vdwg.mxu0
    %1284 = vmatpush.msra.mxu0 0.0
    %1285 = vmatpush.msra.mxu0 0.0
    %1286 = vmatpush.msra.mxu0 0.0
    %1287 = vmatpush.msra.mxu0 0.0
    %1288 = vmatpush.msra.mxu0 0.0
    %1289 = vmatpush.msra.mxu0 0.0
    %1290 = vmatpush.msra.mxu0 0.0
    %1291 = vmatpush.msra.mxu0 0.0
    %v1292 = vand.u32 %v1065, 4294901760
    %1293 = vmatpush.msra.mxu0 %v1292
    %v1294 = vand.u32 %v1064, 4294901760
    %1295 = vmatpush.msra.mxu0 %v1294
    %v1296 = vand.u32 %v1063, 4294901760
    %1297 = vmatpush.msra.mxu0 %v1296
    %v1298 = vand.u32 %v1062, 4294901760
    %1299 = vmatpush.msra.mxu0 %v1298
    %v1300 = vand.u32 %v1061, 4294901760
    %1301 = vmatpush.msra.mxu0 %v1300
    %v1302 = vand.u32 %v1060, 4294901760
    %1303 = vmatpush.msra.mxu0 %v1302
    %v1304 = vand.u32 %v1059, 4294901760
    %1305 = vmatpush.msra.mxu0 %v1304
    %v1306 = vand.u32 %v1058, 4294901760
    %1307 = vmatpush.msra.mxu0 %v1306
    %v1308 = vand.u32 %v1074, 4294901760
    %1309 = vmatmul.f32.gmra.mxu0 %v1308
    %v1310 = vpop.f32.mrf.mxu0
    %v1311 = vadd.f32 %v1282, %v1310
    %1312 = vdwg.mxu0
    %v1313 = vadd.f32 %v513, %v1311
    %vm1314 = vcmask 60416
    %1315 = vst.msk [vmem:[#allocation5] sm:$0xf] %vm1314, %v1313
    // Predicated region
    $region18: #{tpu_custom_call.1} parent=1 // pred_check
      _
    $region19: #{tpu_custom_call.1} parent=1 // pred_check_branch
      %1317 = sbr.rel (0) target = $region21
    $region20: #{tpu_custom_call.1} parent=1 // pred_region
      %1319 = vsyncadd [#allocation4], 0
      %s1321 = sshll.u32 [#allocation5], 4
      %s1322 = int_to_ptr.vmem [resolvable:$true] %s1321
      %s1323 = sshll.u32 %s3, 4
      %s1324 = int_to_ptr.hbm [resolvable:$true] %s1323
      %1326 = dma.vmem_to_hbm [thread:$0]  %s1322, 64, %s1324, [#allocation4]
    $region21: #{tpu_custom_call.1} parent=1 // pred_fallthru
      _
    // Predicated region
    $region22: #{tpu_custom_call.1} parent=1 // pred_check
      _
    $region23: #{tpu_custom_call.1} parent=1 // pred_check_branch
      %1328 = sbr.rel (0) target = $region25
    $region24: #{tpu_custom_call.1} parent=1 // pred_region
      %1330 = dma.done [#allocation4], 64
    $region25: #{tpu_custom_call.1} parent=1 // pred_fallthru
      _
    %1331 = vsyncpa [#allocation3], 1
    %1332 = vsyncpa [#allocation4], 1

</llo_original>
